<compile_context>
chip_gen: v7x
topology: tpu7x:2x2x1
jax: 0.10.0
libtpu: 0.0.40
codegen_flags: <defaults>
</compile_context>

<pallas_src>
import functools

import jax
import jax.numpy as jnp
from jax.experimental import pallas as pl
from jax.experimental.pallas import tpu as pltpu


def _bisehead_kernel(x_ref, w1_ref, shift_ref, pww_ref, pwb_ref, mask_ref,
                     out_ref, patches_ref, *, Wp, Cin_pad, Mpad, Nb):
    # x_ref      : (Nb, Cin_pad, Lx)   flat zero-padded images, bf16 (padded in wrapper)
    # w1_ref     : (Cm, 9*Cin_pad)     3x3 conv weights, tap-major, BN-scale folded, bf16
    # shift_ref  : (Cm, 1)             folded conv-bias + BN shift, f32
    # pww_ref    : (K, Cm)             pointwise 1x1 weight with depthwise weight folded, bf16
    # pwb_ref    : (K, 1)              pointwise bias + pww @ depthwise-bias, f32
    # mask_ref   : (1, Nb*Mpad)        1.0 on the HxW interior, 0.0 elsewhere, f32
    # out_ref    : (Nb, K, Mpad)       channels-first output, lane-dense flat spatial
    # patches_ref: (9*Cin_pad, Nb*Mpad) bf16 VMEM scratch for the im2col patch matrix

    # Stage the 9 im2col taps of all Nb images side-by-side along the lane axis.
    # Each tap is a pure flat shift of the padded image (wrapper guarantees the
    # buffer is zero past the image content so the last tap never reads garbage).
    for n in range(Nb):
        for t in range(9):
            dy, dx = divmod(t, 3)
            off = dy * Wp + dx
            patches_ref[t * Cin_pad:(t + 1) * Cin_pad,
                        n * Mpad:(n + 1) * Mpad] = x_ref[n, :, off:off + Mpad]

    # 3x3 conv (+ folded BN scale) as ONE MXU matmul over the whole block.
    z = jnp.dot(w1_ref[...], patches_ref[...],
                preferred_element_type=jnp.float32)              # (Cm, Nb*Mpad)

    # Folded conv-bias + BN shift, ReLU, then the depthwise conv's zero padding
    # applied as a single interior-mask multiply (the depthwise affine itself is
    # folded into the pointwise weights/bias).
    y = jnp.maximum(z + shift_ref[...], 0.0) * mask_ref[...]
    # TODO(synk): Dropout(0.1) is identity in eval mode; training-mode dropout not modeled.

    # Pointwise 1x1 (with depthwise folded in) as a second MXU matmul.  Result is
    # channels-first and lane-dense -> direct NCHW stores, no transpose anywhere.
    out = jnp.dot(pww_ref[...], y.astype(jnp.bfloat16),
                  preferred_element_type=jnp.float32) + pwb_ref[...]   # (K, Nb*Mpad)
    for n in range(Nb):
        out_ref[n] = out[:, n * Mpad:(n + 1) * Mpad].astype(out_ref.dtype)


def bisehead_forward(x_nchw, params, *, images_per_block=None):
    """x_nchw: (N, Cin, H, W) float32 -> (N, num_class, H+2, W+2) float32."""
    N, Cin, H, W = x_nchw.shape
    Cm = params['shift'].shape[0]
    K = params['pww'].shape[0]
    Cin_pad = params['w1'].shape[1] // 9
    Hp, Wp = H + 2, W + 2
    M = Hp * Wp
    Mpad = pl.cdiv(M, 128) * 128          # lane-dense flat spatial dim

    # Default: whole batch in one grid step (overhead-bound at small sizes; v5e/v6e
    # have a single TensorCore so extra grid steps only add overhead).  On v7x pass
    # images_per_block = N // 2 to shard the parallel batch axis across both cores.
    Nb = N if images_per_block is None else images_per_block
    assert N % Nb == 0, "batch must be divisible by images_per_block"

    # Flat staging-buffer length: must cover the last (dy=2, dx=2) tap slice and the
    # padded-rows content.  VMEM OOB is unchecked, so assert the invariants here.
    Lx = pl.cdiv(2 * Wp + 2 + Mpad, 128) * 128
    assert Lx >= 2 * Wp + 2 + Mpad, (Lx, Wp, Mpad)
    assert (Hp + 2) * Wp <= Lx, (Lx, Hp, Wp)

    # Wrapper-side zero-padding / restriding into the flat im2col staging layout
    # (bf16): image offset by 2 rows / 2 cols inside (Hp+2, Wp) rows, then flattened
    # and padded to Lx.  A few tens of KB of HBM traffic, far cheaper than in-kernel
    # masked stores + buffer zeroing.
    xp = jnp.pad(x_nchw.astype(jnp.bfloat16),
                 ((0, 0), (0, Cin_pad - Cin), (2, 2), (2, 0)))   # (N, Cin_pad, Hp+2, Wp)
    xp = xp.reshape(N, Cin_pad, (Hp + 2) * Wp)
    xp = jnp.pad(xp, ((0, 0), (0, 0), (0, Lx - (Hp + 2) * Wp)))  # (N, Cin_pad, Lx)

    # Interior mask over the (Hp, Wp) output grid (== the depthwise conv's zero
    # padding), lane-padded to Mpad and tiled across the Nb images sharing one RHS.
    ii = jax.lax.broadcasted_iota(jnp.int32, (Hp, Wp), 0)
    jj = jax.lax.broadcasted_iota(jnp.int32, (Hp, Wp), 1)
    mask = (((ii >= 1) & (ii <= H) & (jj >= 1) & (jj <= W))
            .astype(jnp.float32).reshape(1, M))
    mask = jnp.pad(mask, ((0, 0), (0, Mpad - M)))
    mask = jnp.tile(mask, (1, Nb))                               # (1, Nb*Mpad)

    kernel = functools.partial(_bisehead_kernel, Wp=Wp, Cin_pad=Cin_pad,
                               Mpad=Mpad, Nb=Nb)

    # Advisory cost estimate so XLA can schedule neighbours around this tiny call.
    flops = 2 * N * Mpad * (Cm * 9 * Cin_pad + K * Cm)
    bytes_accessed = (N * Cin_pad * Lx * 2            # bf16 padded input
                      + N * K * Mpad * 4              # f32 output
                      + Cm * 9 * Cin_pad * 2 + K * Cm * 2
                      + (Cm + K) * 4 + Nb * Mpad * 4)

    out_flat = pl.pallas_call(
        kernel,
        out_shape=jax.ShapeDtypeStruct((N, K, Mpad), jnp.float32),
        grid_spec=pltpu.PrefetchScalarGridSpec(
            num_scalar_prefetch=0,
            grid=(N // Nb,),
            in_specs=[
                pl.BlockSpec((Nb, Cin_pad, Lx), lambda b: (b, 0, 0)),
                pl.BlockSpec((Cm, 9 * Cin_pad), lambda b: (0, 0)),
                pl.BlockSpec((Cm, 1), lambda b: (0, 0)),
                pl.BlockSpec((K, Cm), lambda b: (0, 0)),
                pl.BlockSpec((K, 1), lambda b: (0, 0)),
                pl.BlockSpec((1, Nb * Mpad), lambda b: (0, 0)),
            ],
            out_specs=pl.BlockSpec((Nb, K, Mpad), lambda b: (b, 0, 0)),
            scratch_shapes=[pltpu.VMEM((9 * Cin_pad, Nb * Mpad), jnp.bfloat16)],
        ),
        compiler_params=pltpu.CompilerParams(dimension_semantics=("parallel",)),
        cost_estimate=pl.CostEstimate(flops=flops, transcendentals=0,
                                      bytes_accessed=bytes_accessed),
    )(xp, params['w1'], params['shift'], params['pww'], params['pwb'], mask)

    # Lane-padding slice (tiny) + free reshape; output is already NCHW.
    return out_flat[:, :, :M].reshape(N, K, Hp, Wp)


def make_params(key, in_channels, inter_channels, num_class):
    """Deterministic synthetic parameters, algebraically folded for the kernel."""
    ks = jax.random.split(key, 10)
    Cin, Cm, K = in_channels, inter_channels, num_class
    eps = 1e-5

    # _ConvBNReLU: Conv2d(Cin, Cm, 3, 1, 1) weight (Cm, Cin, 3, 3) + bias (Cm,)
    w_conv = 0.1 * jax.random.normal(ks[0], (Cm, Cin, 3, 3), jnp.float32)
    b_conv = 0.1 * jax.random.normal(ks[1], (Cm,), jnp.float32)
    # BatchNorm2d (eval): affine + running stats
    gamma = 1.0 + 0.1 * jax.random.normal(ks[2], (Cm,), jnp.float32)
    beta = 0.1 * jax.random.normal(ks[3], (Cm,), jnp.float32)
    r_mean = 0.1 * jax.random.normal(ks[4], (Cm,), jnp.float32)
    r_var = 0.5 + jnp.abs(jax.random.normal(ks[5], (Cm,), jnp.float32))
    # Depthwise_Separable_Conv(Cm, K, kernel_size=1): depthwise (Cm,1,1,1), pointwise (K,Cm,1,1)
    w_dw = 0.2 * jax.random.normal(ks[6], (Cm,), jnp.float32)
    b_dw = 0.1 * jax.random.normal(ks[7], (Cm,), jnp.float32)
    w_pw = 0.2 * jax.random.normal(ks[8], (K, Cm), jnp.float32)
    b_pw = 0.1 * jax.random.normal(ks[9], (K,), jnp.float32)

    s = gamma / jnp.sqrt(r_var + eps)

    # 3x3 conv weights in tap-major im2col form with the BN scale folded in (f32,
    # BEFORE the bf16 cast); input channels zero-padded to a sublane multiple.
    Cin_pad = max(8, ((Cin + 7) // 8) * 8)
    w1 = jnp.transpose(w_conv, (0, 2, 3, 1)).reshape(Cm, 9, Cin)      # (Cm, tap, Cin)
    w1 = w1 * s[:, None, None]
    w1 = jnp.zeros((Cm, 9, Cin_pad), jnp.float32).at[:, :, :Cin].set(w1)
    w1 = w1.reshape(Cm, 9 * Cin_pad).astype(jnp.bfloat16)

    # Fold the depthwise 1x1 affine into the pointwise stage (f32, then bf16 cast).
    pww_eff = (w_pw * w_dw[None, :]).astype(jnp.bfloat16)             # (K, Cm)
    pwb_eff = (b_pw + w_pw @ b_dw).reshape(K, 1)                      # (K, 1)

    raw = dict(w_conv=w_conv, b_conv=b_conv, gamma=gamma, beta=beta,
               r_mean=r_mean, r_var=r_var, eps=eps,
               w_dw=w_dw, b_dw=b_dw, w_pw=w_pw, b_pw=b_pw)
    folded = dict(
        w1=w1,
        shift=((b_conv - r_mean) * s + beta).reshape(Cm, 1),
        pww=pww_eff,
        pwb=pwb_eff,
    )
    return folded, raw


def reference_forward(x_nchw, raw):
    """Pure-JAX reference mirroring the PyTorch forward (eval mode)."""
    y = jax.lax.conv_general_dilated(
        x_nchw, raw['w_conv'], window_strides=(1, 1),
        padding=((1, 1), (1, 1)),
        dimension_numbers=('NCHW', 'OIHW', 'NCHW'))
    y = y + raw['b_conv'].reshape(1, -1, 1, 1)
    y = (y - raw['r_mean'].reshape(1, -1, 1, 1)) / jnp.sqrt(
        raw['r_var'].reshape(1, -1, 1, 1) + raw['eps'])
    y = y * raw['gamma'].reshape(1, -1, 1, 1) + raw['beta'].reshape(1, -1, 1, 1)
    y = jnp.maximum(y, 0.0)
    # Dropout: identity (eval).
    # Depthwise 1x1 conv with padding=1 (groups=Cm) == pad then per-channel scale+bias.
    yp = jnp.pad(y, ((0, 0), (0, 0), (1, 1), (1, 1)))
    t = yp * raw['w_dw'].reshape(1, -1, 1, 1) + raw['b_dw'].reshape(1, -1, 1, 1)
    out = jnp.einsum('nchw,kc->nkhw', t, raw['w_pw']) + raw['b_pw'].reshape(1, -1, 1, 1)
    return out


if __name__ == "__main__":
    N, Cin, H, W = 2, 4, 16, 16          # batch, in_channels, spatial
    Cm, num_class = 16, 8                # inter_channels, num_class

    key = jax.random.PRNGKey(0)
    kx, kp = jax.random.split(key)
    x = jax.random.normal(kx, (N, Cin, H, W), jnp.float32)
    folded, raw = make_params(kp, Cin, Cm, num_class)

    out = jax.jit(functools.partial(bisehead_forward, params=folded))(x)
    out = jax.block_until_ready(out)

    assert out.shape == (N, num_class, H + 2, W + 2), out.shape

    ref = reference_forward(x, raw)
    if not bool(jnp.allclose(out, ref, atol=1e-2, rtol=1e-2)):
        raise AssertionError(
            f"Pallas kernel mismatch vs reference: max err "
            f"{float(jnp.max(jnp.abs(out - ref)))}")

    print("KERNEL_OK")
</pallas_src>

<mosaic_0001>
module attributes {stable_mosaic.version = 11 : i64} {
  func.func @_bisehead_kernel(%arg0: i32, %arg1: memref<2x8x512xbf16, #tpu.memory_space<vmem>>, %arg2: memref<16x72xbf16, #tpu.memory_space<vmem>>, %arg3: memref<16x1xf32, #tpu.memory_space<vmem>>, %arg4: memref<8x16xbf16, #tpu.memory_space<vmem>>, %arg5: memref<8x1xf32, #tpu.memory_space<vmem>>, %arg6: memref<1x768xf32, #tpu.memory_space<vmem>>, %arg7: memref<2x8x384xf32, #tpu.memory_space<vmem>>, %arg8: memref<72x768xbf16, #tpu.memory_space<vmem>>) attributes {dimension_semantics = [#tpu.dimension_semantics<parallel>], iteration_bounds = array<i64: 1>, scalar_prefetch = 0 : i64, scratch_operands = 1 : i64, tpu.core_type = #tpu.core_type<tc>, window_params = [{transform_indices = @transform_0, window_bounds = array<i64: 2, 8, 512>}, {pipeline_mode = #tpu.pipeline_mode<synchronous>, transform_indices = @transform_1, window_bounds = array<i64: 16, 72>}, {pipeline_mode = #tpu.pipeline_mode<synchronous>, transform_indices = @transform_2, window_bounds = array<i64: 16, 1>}, {pipeline_mode = #tpu.pipeline_mode<synchronous>, transform_indices = @transform_3, window_bounds = array<i64: 8, 16>}, {pipeline_mode = #tpu.pipeline_mode<synchronous>, transform_indices = @transform_4, window_bounds = array<i64: 8, 1>}, {pipeline_mode = #tpu.pipeline_mode<synchronous>, transform_indices = @transform_5, window_bounds = array<i64: 1, 768>}, {transform_indices = @transform_6, window_bounds = array<i64: 2, 8, 384>}]} {
    %c0 = arith.constant 0 : index
    %c0_0 = arith.constant 0 : index
    %c0_1 = arith.constant 0 : index
    %0 = vector.load %arg1[%c0, %c0_0, %c0_1] : memref<2x8x512xbf16, #tpu.memory_space<vmem>>, vector<1x8x384xbf16>
    %1 = vector.shape_cast %0 : vector<1x8x384xbf16> to vector<8x384xbf16>
    %c0_2 = arith.constant 0 : index
    %c0_3 = arith.constant 0 : index
    %2 = vector.load %arg8[%c0_2, %c0_3] : memref<72x768xbf16, #tpu.memory_space<vmem>>, vector<8x384xbf16>
    tpu.vector_store %arg8[%c0_2, %c0_3], %1 {strides = array<i32>} : memref<72x768xbf16, #tpu.memory_space<vmem>>, vector<8x384xbf16>,
    %c0_4 = arith.constant 0 : index
    %c0_5 = arith.constant 0 : index
    %c1 = arith.constant 1 : index
    %3 = vector.load %arg1[%c0_4, %c0_5, %c1] : memref<2x8x512xbf16, #tpu.memory_space<vmem>>, vector<1x8x384xbf16>
    %4 = vector.shape_cast %3 : vector<1x8x384xbf16> to vector<8x384xbf16>
    %c8 = arith.constant 8 : index
    %c0_6 = arith.constant 0 : index
    %5 = vector.load %arg8[%c8, %c0_6] : memref<72x768xbf16, #tpu.memory_space<vmem>>, vector<8x384xbf16>
    tpu.vector_store %arg8[%c8, %c0_6], %4 {strides = array<i32>} : memref<72x768xbf16, #tpu.memory_space<vmem>>, vector<8x384xbf16>,
    %c0_7 = arith.constant 0 : index
    %c0_8 = arith.constant 0 : index
    %c2 = arith.constant 2 : index
    %6 = vector.load %arg1[%c0_7, %c0_8, %c2] : memref<2x8x512xbf16, #tpu.memory_space<vmem>>, vector<1x8x384xbf16>
    %7 = vector.shape_cast %6 : vector<1x8x384xbf16> to vector<8x384xbf16>
    %c16 = arith.constant 16 : index
    %c0_9 = arith.constant 0 : index
    %8 = vector.load %arg8[%c16, %c0_9] : memref<72x768xbf16, #tpu.memory_space<vmem>>, vector<8x384xbf16>
    tpu.vector_store %arg8[%c16, %c0_9], %7 {strides = array<i32>} : memref<72x768xbf16, #tpu.memory_space<vmem>>, vector<8x384xbf16>,
    %c0_10 = arith.constant 0 : index
    %c0_11 = arith.constant 0 : index
    %c18 = arith.constant 18 : index
    %9 = vector.load %arg1[%c0_10, %c0_11, %c18] : memref<2x8x512xbf16, #tpu.memory_space<vmem>>, vector<1x8x384xbf16>
    %10 = vector.shape_cast %9 : vector<1x8x384xbf16> to vector<8x384xbf16>
    %c24 = arith.constant 24 : index
    %c0_12 = arith.constant 0 : index
    %11 = vector.load %arg8[%c24, %c0_12] : memref<72x768xbf16, #tpu.memory_space<vmem>>, vector<8x384xbf16>
    tpu.vector_store %arg8[%c24, %c0_12], %10 {strides = array<i32>} : memref<72x768xbf16, #tpu.memory_space<vmem>>, vector<8x384xbf16>,
    %c0_13 = arith.constant 0 : index
    %c0_14 = arith.constant 0 : index
    %c19 = arith.constant 19 : index
    %12 = vector.load %arg1[%c0_13, %c0_14, %c19] : memref<2x8x512xbf16, #tpu.memory_space<vmem>>, vector<1x8x384xbf16>
    %13 = vector.shape_cast %12 : vector<1x8x384xbf16> to vector<8x384xbf16>
    %c32 = arith.constant 32 : index
    %c0_15 = arith.constant 0 : index
    %14 = vector.load %arg8[%c32, %c0_15] : memref<72x768xbf16, #tpu.memory_space<vmem>>, vector<8x384xbf16>
    tpu.vector_store %arg8[%c32, %c0_15], %13 {strides = array<i32>} : memref<72x768xbf16, #tpu.memory_space<vmem>>, vector<8x384xbf16>,
    %c0_16 = arith.constant 0 : index
    %c0_17 = arith.constant 0 : index
    %c20 = arith.constant 20 : index
    %15 = vector.load %arg1[%c0_16, %c0_17, %c20] : memref<2x8x512xbf16, #tpu.memory_space<vmem>>, vector<1x8x384xbf16>
    %16 = vector.shape_cast %15 : vector<1x8x384xbf16> to vector<8x384xbf16>
    %c40 = arith.constant 40 : index
    %c0_18 = arith.constant 0 : index
    %17 = vector.load %arg8[%c40, %c0_18] : memref<72x768xbf16, #tpu.memory_space<vmem>>, vector<8x384xbf16>
    tpu.vector_store %arg8[%c40, %c0_18], %16 {strides = array<i32>} : memref<72x768xbf16, #tpu.memory_space<vmem>>, vector<8x384xbf16>,
    %c0_19 = arith.constant 0 : index
    %c0_20 = arith.constant 0 : index
    %c36 = arith.constant 36 : index
    %18 = vector.load %arg1[%c0_19, %c0_20, %c36] : memref<2x8x512xbf16, #tpu.memory_space<vmem>>, vector<1x8x384xbf16>
    %19 = vector.shape_cast %18 : vector<1x8x384xbf16> to vector<8x384xbf16>
    %c48 = arith.constant 48 : index
    %c0_21 = arith.constant 0 : index
    %20 = vector.load %arg8[%c48, %c0_21] : memref<72x768xbf16, #tpu.memory_space<vmem>>, vector<8x384xbf16>
    tpu.vector_store %arg8[%c48, %c0_21], %19 {strides = array<i32>} : memref<72x768xbf16, #tpu.memory_space<vmem>>, vector<8x384xbf16>,
    %c0_22 = arith.constant 0 : index
    %c0_23 = arith.constant 0 : index
    %c37 = arith.constant 37 : index
    %21 = vector.load %arg1[%c0_22, %c0_23, %c37] : memref<2x8x512xbf16, #tpu.memory_space<vmem>>, vector<1x8x384xbf16>
    %22 = vector.shape_cast %21 : vector<1x8x384xbf16> to vector<8x384xbf16>
    %c56 = arith.constant 56 : index
    %c0_24 = arith.constant 0 : index
    %23 = vector.load %arg8[%c56, %c0_24] : memref<72x768xbf16, #tpu.memory_space<vmem>>, vector<8x384xbf16>
    tpu.vector_store %arg8[%c56, %c0_24], %22 {strides = array<i32>} : memref<72x768xbf16, #tpu.memory_space<vmem>>, vector<8x384xbf16>,
    %c0_25 = arith.constant 0 : index
    %c0_26 = arith.constant 0 : index
    %c38 = arith.constant 38 : index
    %24 = vector.load %arg1[%c0_25, %c0_26, %c38] : memref<2x8x512xbf16, #tpu.memory_space<vmem>>, vector<1x8x384xbf16>
    %25 = vector.shape_cast %24 : vector<1x8x384xbf16> to vector<8x384xbf16>
    %c64 = arith.constant 64 : index
    %c0_27 = arith.constant 0 : index
    %26 = vector.load %arg8[%c64, %c0_27] : memref<72x768xbf16, #tpu.memory_space<vmem>>, vector<8x384xbf16>
    tpu.vector_store %arg8[%c64, %c0_27], %25 {strides = array<i32>} : memref<72x768xbf16, #tpu.memory_space<vmem>>, vector<8x384xbf16>,
    %c1_28 = arith.constant 1 : index
    %c0_29 = arith.constant 0 : index
    %c0_30 = arith.constant 0 : index
    %27 = vector.load %arg1[%c1_28, %c0_29, %c0_30] : memref<2x8x512xbf16, #tpu.memory_space<vmem>>, vector<1x8x384xbf16>
    %28 = vector.shape_cast %27 : vector<1x8x384xbf16> to vector<8x384xbf16>
    %c0_31 = arith.constant 0 : index
    %c384 = arith.constant 384 : index
    %29 = vector.load %arg8[%c0_31, %c384] : memref<72x768xbf16, #tpu.memory_space<vmem>>, vector<8x384xbf16>
    tpu.vector_store %arg8[%c0_31, %c384], %28 {strides = array<i32>} : memref<72x768xbf16, #tpu.memory_space<vmem>>, vector<8x384xbf16>,
    %c1_32 = arith.constant 1 : index
    %c0_33 = arith.constant 0 : index
    %c1_34 = arith.constant 1 : index
    %30 = vector.load %arg1[%c1_32, %c0_33, %c1_34] : memref<2x8x512xbf16, #tpu.memory_space<vmem>>, vector<1x8x384xbf16>
    %31 = vector.shape_cast %30 : vector<1x8x384xbf16> to vector<8x384xbf16>
    %c8_35 = arith.constant 8 : index
    %c384_36 = arith.constant 384 : index
    %32 = vector.load %arg8[%c8_35, %c384_36] : memref<72x768xbf16, #tpu.memory_space<vmem>>, vector<8x384xbf16>
    tpu.vector_store %arg8[%c8_35, %c384_36], %31 {strides = array<i32>} : memref<72x768xbf16, #tpu.memory_space<vmem>>, vector<8x384xbf16>,
    %c1_37 = arith.constant 1 : index
    %c0_38 = arith.constant 0 : index
    %c2_39 = arith.constant 2 : index
    %33 = vector.load %arg1[%c1_37, %c0_38, %c2_39] : memref<2x8x512xbf16, #tpu.memory_space<vmem>>, vector<1x8x384xbf16>
    %34 = vector.shape_cast %33 : vector<1x8x384xbf16> to vector<8x384xbf16>
    %c16_40 = arith.constant 16 : index
    %c384_41 = arith.constant 384 : index
    %35 = vector.load %arg8[%c16_40, %c384_41] : memref<72x768xbf16, #tpu.memory_space<vmem>>, vector<8x384xbf16>
    tpu.vector_store %arg8[%c16_40, %c384_41], %34 {strides = array<i32>} : memref<72x768xbf16, #tpu.memory_space<vmem>>, vector<8x384xbf16>,
    %c1_42 = arith.constant 1 : index
    %c0_43 = arith.constant 0 : index
    %c18_44 = arith.constant 18 : index
    %36 = vector.load %arg1[%c1_42, %c0_43, %c18_44] : memref<2x8x512xbf16, #tpu.memory_space<vmem>>, vector<1x8x384xbf16>
    %37 = vector.shape_cast %36 : vector<1x8x384xbf16> to vector<8x384xbf16>
    %c24_45 = arith.constant 24 : index
    %c384_46 = arith.constant 384 : index
    %38 = vector.load %arg8[%c24_45, %c384_46] : memref<72x768xbf16, #tpu.memory_space<vmem>>, vector<8x384xbf16>
    tpu.vector_store %arg8[%c24_45, %c384_46], %37 {strides = array<i32>} : memref<72x768xbf16, #tpu.memory_space<vmem>>, vector<8x384xbf16>,
    %c1_47 = arith.constant 1 : index
    %c0_48 = arith.constant 0 : index
    %c19_49 = arith.constant 19 : index
    %39 = vector.load %arg1[%c1_47, %c0_48, %c19_49] : memref<2x8x512xbf16, #tpu.memory_space<vmem>>, vector<1x8x384xbf16>
    %40 = vector.shape_cast %39 : vector<1x8x384xbf16> to vector<8x384xbf16>
    %c32_50 = arith.constant 32 : index
    %c384_51 = arith.constant 384 : index
    %41 = vector.load %arg8[%c32_50, %c384_51] : memref<72x768xbf16, #tpu.memory_space<vmem>>, vector<8x384xbf16>
    tpu.vector_store %arg8[%c32_50, %c384_51], %40 {strides = array<i32>} : memref<72x768xbf16, #tpu.memory_space<vmem>>, vector<8x384xbf16>,
    %c1_52 = arith.constant 1 : index
    %c0_53 = arith.constant 0 : index
    %c20_54 = arith.constant 20 : index
    %42 = vector.load %arg1[%c1_52, %c0_53, %c20_54] : memref<2x8x512xbf16, #tpu.memory_space<vmem>>, vector<1x8x384xbf16>
    %43 = vector.shape_cast %42 : vector<1x8x384xbf16> to vector<8x384xbf16>
    %c40_55 = arith.constant 40 : index
    %c384_56 = arith.constant 384 : index
    %44 = vector.load %arg8[%c40_55, %c384_56] : memref<72x768xbf16, #tpu.memory_space<vmem>>, vector<8x384xbf16>
    tpu.vector_store %arg8[%c40_55, %c384_56], %43 {strides = array<i32>} : memref<72x768xbf16, #tpu.memory_space<vmem>>, vector<8x384xbf16>,
    %c1_57 = arith.constant 1 : index
    %c0_58 = arith.constant 0 : index
    %c36_59 = arith.constant 36 : index
    %45 = vector.load %arg1[%c1_57, %c0_58, %c36_59] : memref<2x8x512xbf16, #tpu.memory_space<vmem>>, vector<1x8x384xbf16>
    %46 = vector.shape_cast %45 : vector<1x8x384xbf16> to vector<8x384xbf16>
    %c48_60 = arith.constant 48 : index
    %c384_61 = arith.constant 384 : index
    %47 = vector.load %arg8[%c48_60, %c384_61] : memref<72x768xbf16, #tpu.memory_space<vmem>>, vector<8x384xbf16>
    tpu.vector_store %arg8[%c48_60, %c384_61], %46 {strides = array<i32>} : memref<72x768xbf16, #tpu.memory_space<vmem>>, vector<8x384xbf16>,
    %c1_62 = arith.constant 1 : index
    %c0_63 = arith.constant 0 : index
    %c37_64 = arith.constant 37 : index
    %48 = vector.load %arg1[%c1_62, %c0_63, %c37_64] : memref<2x8x512xbf16, #tpu.memory_space<vmem>>, vector<1x8x384xbf16>
    %49 = vector.shape_cast %48 : vector<1x8x384xbf16> to vector<8x384xbf16>
    %c56_65 = arith.constant 56 : index
    %c384_66 = arith.constant 384 : index
    %50 = vector.load %arg8[%c56_65, %c384_66] : memref<72x768xbf16, #tpu.memory_space<vmem>>, vector<8x384xbf16>
    tpu.vector_store %arg8[%c56_65, %c384_66], %49 {strides = array<i32>} : memref<72x768xbf16, #tpu.memory_space<vmem>>, vector<8x384xbf16>,
    %c1_67 = arith.constant 1 : index
    %c0_68 = arith.constant 0 : index
    %c38_69 = arith.constant 38 : index
    %51 = vector.load %arg1[%c1_67, %c0_68, %c38_69] : memref<2x8x512xbf16, #tpu.memory_space<vmem>>, vector<1x8x384xbf16>
    %52 = vector.shape_cast %51 : vector<1x8x384xbf16> to vector<8x384xbf16>
    %c64_70 = arith.constant 64 : index
    %c384_71 = arith.constant 384 : index
    %53 = vector.load %arg8[%c64_70, %c384_71] : memref<72x768xbf16, #tpu.memory_space<vmem>>, vector<8x384xbf16>
    tpu.vector_store %arg8[%c64_70, %c384_71], %52 {strides = array<i32>} : memref<72x768xbf16, #tpu.memory_space<vmem>>, vector<8x384xbf16>,
    %c0_72 = arith.constant 0 : index
    %c0_73 = arith.constant 0 : index
    %54 = vector.load %arg2[%c0_72, %c0_73] : memref<16x72xbf16, #tpu.memory_space<vmem>>, vector<16x72xbf16>
    %c0_74 = arith.constant 0 : index
    %c0_75 = arith.constant 0 : index
    %55 = vector.load %arg8[%c0_74, %c0_75] : memref<72x768xbf16, #tpu.memory_space<vmem>>, vector<72x768xbf16>
    %cst = arith.constant dense<0.000000e+00> : vector<16x768xf32>
    %56 = tpu.matmul %54, %55, %cst {dimension_numbers = #tpu.dot_dimension_numbers<[1], [0], [0], [1], [0, 0, 1, 1], [], []>} : vector<16x72xbf16>, vector<72x768xbf16>, vector<16x768xf32> -> vector<16x768xf32>
    %c0_76 = arith.constant 0 : index
    %c0_77 = arith.constant 0 : index
    %57 = vector.load %arg3[%c0_76, %c0_77] : memref<16x1xf32, #tpu.memory_space<vmem>>, vector<16x1xf32>
    %58 = vector.broadcast %57 : vector<16x1xf32> to vector<16x768xf32>
    %59 = arith.addf %56, %58 : vector<16x768xf32>
    %cst_78 = arith.constant 0.000000e+00 : f32
    %60 = vector.broadcast %cst_78 : f32 to vector<16x768xf32>
    %61 = arith.maximumf %59, %60 : vector<16x768xf32>
    %c0_79 = arith.constant 0 : index
    %c0_80 = arith.constant 0 : index
    %62 = vector.load %arg6[%c0_79, %c0_80] : memref<1x768xf32, #tpu.memory_space<vmem>>, vector<1x768xf32>
    %63 = vector.broadcast %62 : vector<1x768xf32> to vector<16x768xf32>
    %64 = arith.mulf %61, %63 : vector<16x768xf32>
    %c0_81 = arith.constant 0 : index
    %c0_82 = arith.constant 0 : index
    %65 = vector.load %arg4[%c0_81, %c0_82] : memref<8x16xbf16, #tpu.memory_space<vmem>>, vector<8x16xbf16>
    %66 = arith.truncf %64 : vector<16x768xf32> to vector<16x768xbf16>
    %cst_83 = arith.constant dense<0.000000e+00> : vector<8x768xf32>
    %67 = tpu.matmul %65, %66, %cst_83 {dimension_numbers = #tpu.dot_dimension_numbers<[1], [0], [0], [1], [0, 0, 1, 1], [], []>} : vector<8x16xbf16>, vector<16x768xbf16>, vector<8x768xf32> -> vector<8x768xf32>
    %c0_84 = arith.constant 0 : index
    %c0_85 = arith.constant 0 : index
    %68 = vector.load %arg5[%c0_84, %c0_85] : memref<8x1xf32, #tpu.memory_space<vmem>>, vector<8x1xf32>
    %69 = vector.broadcast %68 : vector<8x1xf32> to vector<8x768xf32>
    %70 = arith.addf %67, %69 : vector<8x768xf32>
    %71 = vector.extract_strided_slice %70 {offsets = [0, 0], sizes = [8, 384], strides = [1, 1]} : vector<8x768xf32> to vector<8x384xf32>
    %c0_86 = arith.constant 0 : index
    %c0_87 = arith.constant 0 : index
    %c0_88 = arith.constant 0 : index
    %72 = vector.load %arg7[%c0_86, %c0_87, %c0_88] : memref<2x8x384xf32, #tpu.memory_space<vmem>>, vector<1x8x384xf32>
    %73 = vector.shape_cast %72 : vector<1x8x384xf32> to vector<8x384xf32>
    %74 = vector.shape_cast %71 : vector<8x384xf32> to vector<1x8x384xf32>
    tpu.vector_store %arg7[%c0_86, %c0_87, %c0_88], %74 {strides = array<i32>} : memref<2x8x384xf32, #tpu.memory_space<vmem>>, vector<1x8x384xf32>,
    %75 = vector.extract_strided_slice %70 {offsets = [0, 384], sizes = [8, 384], strides = [1, 1]} : vector<8x768xf32> to vector<8x384xf32>
    %c1_89 = arith.constant 1 : index
    %c0_90 = arith.constant 0 : index
    %c0_91 = arith.constant 0 : index
    %76 = vector.load %arg7[%c1_89, %c0_90, %c0_91] : memref<2x8x384xf32, #tpu.memory_space<vmem>>, vector<1x8x384xf32>
    %77 = vector.shape_cast %76 : vector<1x8x384xf32> to vector<8x384xf32>
    %78 = vector.shape_cast %75 : vector<8x384xf32> to vector<1x8x384xf32>
    tpu.vector_store %arg7[%c1_89, %c0_90, %c0_91], %78 {strides = array<i32>} : memref<2x8x384xf32, #tpu.memory_space<vmem>>, vector<1x8x384xf32>,
    return
  }
  func.func @transform_0(%arg0: i32) -> (i32, i32, i32) {
    %c0_i32 = arith.constant 0 : i32
    %c0_i32_0 = arith.constant 0 : i32
    %c0_i32_1 = arith.constant 0 : i32
    return %arg0, %c0_i32, %c0_i32_0 : i32, i32, i32
  }
  func.func @transform_1(%arg0: i32) -> (i32, i32) {
    %c0_i32 = arith.constant 0 : i32
    %c0_i32_0 = arith.constant 0 : i32
    %c0_i32_1 = arith.constant 0 : i32
    return %c0_i32, %c0_i32_0 : i32, i32
  }
  func.func @transform_2(%arg0: i32) -> (i32, i32) {
    %c0_i32 = arith.constant 0 : i32
    %c0_i32_0 = arith.constant 0 : i32
    %c0_i32_1 = arith.constant 0 : i32
    return %c0_i32, %c0_i32_0 : i32, i32
  }
  func.func @transform_3(%arg0: i32) -> (i32, i32) {
    %c0_i32 = arith.constant 0 : i32
    %c0_i32_0 = arith.constant 0 : i32
    %c0_i32_1 = arith.constant 0 : i32
    return %c0_i32, %c0_i32_0 : i32, i32
  }
  func.func @transform_4(%arg0: i32) -> (i32, i32) {
    %c0_i32 = arith.constant 0 : i32
    %c0_i32_0 = arith.constant 0 : i32
    %c0_i32_1 = arith.constant 0 : i32
    return %c0_i32, %c0_i32_0 : i32, i32
  }
  func.func @transform_5(%arg0: i32) -> (i32, i32) {
    %c0_i32 = arith.constant 0 : i32
    %c0_i32_0 = arith.constant 0 : i32
    %c0_i32_1 = arith.constant 0 : i32
    return %c0_i32, %c0_i32_0 : i32, i32
  }
  func.func @transform_6(%arg0: i32) -> (i32, i32, i32) {
    %c0_i32 = arith.constant 0 : i32
    %c0_i32_0 = arith.constant 0 : i32
    %c0_i32_1 = arith.constant 0 : i32
    return %arg0, %c0_i32, %c0_i32_0 : i32, i32, i32
  }
}

</mosaic_0001>

<llo_original>
// kernel: bisehead_forward.1
$region0: #{bisehead_forward.1}
  #allocation0 [shape = 'u32[]', space=smem, size = 0x4, offset = 0x4, fixed_abs, tag = 'smem constant byte address 0x4 - core index']
  #allocation1 [shape = 'u32[144,128]{1,0:T(1,128)}', space=vmem, size = 0x12000, scoped, tag = 'internal scratch']
  #allocation2 [shape = 'bf16[72,768]{1,0:T(8,128)(2,1)}', space=vmem, size = 0x1b000, scoped, tag = 'scratch operand']
  %s0 = inlined_call_operand.vmem [shape: bf16[2,8,512], index: 0, kind: input, shape index: {}]
  %s1 = inlined_call_operand.vmem [shape: bf16[16,72], index: 1, kind: input, shape index: {}]
  %s2 = inlined_call_operand.vmem [shape: f32[16,1], index: 2, kind: input, shape index: {}]
  %s3 = inlined_call_operand.vmem [shape: bf16[8,16], index: 3, kind: input, shape index: {}]
  %s4 = inlined_call_operand.vmem [shape: f32[8,1], index: 4, kind: input, shape index: {}]
  %s5 = inlined_call_operand.vmem [shape: f32[1,768], index: 5, kind: input, shape index: {}]
  %s6 = inlined_call_operand.vmem [shape: f32[2,8,384], index: 6, kind: output, shape index: {}]
  %s7 = sld [smem:[#allocation0]]
  $region34: #{bisehead_forward.1} parent=0
    _
  %s9 = ssub.s32 1, %s7
  %s10 = scalar_select 0, %s9, %s7
  // Predicated region
  $region2: #{bisehead_forward.1} parent=0 // pred_check
    _
  $region3: #{bisehead_forward.1} parent=0 // pred_check_branch
    %12 = sbr.rel (0) target = $region5
  $region4: #{bisehead_forward.1} parent=0 // pred_region
    _
  $region5: #{bisehead_forward.1} parent=0 // pred_fallthru
    _
  // Predicated region
  $region6: #{bisehead_forward.1} parent=0 // pred_check
    _
  $region7: #{bisehead_forward.1} parent=0 // pred_check_branch
    %14 = sbr.rel (0) target = $region9
  $region8: #{bisehead_forward.1} parent=0 // pred_region
    _
  $region9: #{bisehead_forward.1} parent=0 // pred_fallthru
    _
  // Predicated region
  $region10: #{bisehead_forward.1} parent=0 // pred_check
    _
  $region11: #{bisehead_forward.1} parent=0 // pred_check_branch
    %16 = sbr.rel (0) target = $region13
  $region12: #{bisehead_forward.1} parent=0 // pred_region
    _
  $region13: #{bisehead_forward.1} parent=0 // pred_fallthru
    _
  // Predicated region
  $region14: #{bisehead_forward.1} parent=0 // pred_check
    _
  $region15: #{bisehead_forward.1} parent=0 // pred_check_branch
    %18 = sbr.rel (0) target = $region17
  $region16: #{bisehead_forward.1} parent=0 // pred_region
    _
  $region17: #{bisehead_forward.1} parent=0 // pred_fallthru
    _
  // Predicated region
  $region18: #{bisehead_forward.1} parent=0 // pred_check
    _
  $region19: #{bisehead_forward.1} parent=0 // pred_check_branch
    %20 = sbr.rel (0) target = $region21
  $region20: #{bisehead_forward.1} parent=0 // pred_region
    _
  $region21: #{bisehead_forward.1} parent=0 // pred_fallthru
    _
  // Predicated region
  $region22: #{bisehead_forward.1} parent=0 // pred_check
    _
  $region23: #{bisehead_forward.1} parent=0 // pred_check_branch
    %22 = sbr.rel (0) target = $region25
  $region24: #{bisehead_forward.1} parent=0 // pred_region
    _
  $region25: #{bisehead_forward.1} parent=0 // pred_fallthru
    _
  %v24 = vld [vmem:[%s0] sm:$0xff]
  %v25 = vld [vmem:[%s0 + $0x8] sm:$0xf]
  %26 = vst [vmem:[#allocation2] sm:$0xff] %v24
  %27 = vst [vmem:[#allocation2 + $0x8] sm:$0xf] %v25
  %v28 = vld [vmem:[%s0] sm:$0xff]
  %v29 = vld [vmem:[%s0 + $0x8] sm:$0xff]
  %32 = vrot.lane.b32.xlu0 %v28, 127
  %v33 = vpop.permute.xlu0 %32
  %34 = vrot.lane.b32.xlu0 %v29, 127
  %v35 = vpop.permute.xlu0 %34
  %v36 = vrot.slane %v33, 4
  %v37 = vrot.slane %v35, 4
  %vm38 = vcmask 1043456
  %v39 = vsel %vm38, %v36, %v37
  %vm40 = vcmask 1039360
  %v41 = vsel %vm40, %v33, %v39
  %v42 = vsel %vm40, %v35, %v37
  %45 = vst [vmem:[#allocation2 + $0x18] sm:$0xff] %v41
  %46 = vst [vmem:[#allocation2 + $0x20] sm:$0xf] %v42
  %v47 = vld [vmem:[%s0] sm:$0xff]
  %v48 = vld [vmem:[%s0 + $0x8] sm:$0xff]
  %51 = vrot.lane.b32.xlu0 %v47, 126
  %v52 = vpop.permute.xlu0 %51
  %53 = vrot.lane.b32.xlu0 %v48, 126
  %v54 = vpop.permute.xlu0 %53
  %v55 = vrot.slane %v52, 4
  %v56 = vrot.slane %v54, 4
  %v57 = vsel %vm38, %v55, %v56
  %vm58 = vcmask 1031168
  %v59 = vsel %vm58, %v52, %v57
  %v60 = vsel %vm58, %v54, %v56
  %63 = vst [vmem:[#allocation2 + $0x30] sm:$0xff] %v59
  %64 = vst [vmem:[#allocation2 + $0x38] sm:$0xf] %v60
  %v65 = vld [vmem:[%s0] sm:$0xff]
  %v66 = vld [vmem:[%s0 + $0x8] sm:$0xff]
  %69 = vrot.lane.b32.xlu0 %v65, 110
  %v70 = vpop.permute.xlu0 %69
  %71 = vrot.lane.b32.xlu0 %v66, 110
  %v72 = vpop.permute.xlu0 %71
  %v73 = vrot.slane %v70, 4
  %v74 = vrot.slane %v72, 4
  %v75 = vsel %vm38, %v73, %v74
  %vm76 = vcmask 900096
  %v77 = vsel %vm76, %v70, %v75
  %v78 = vsel %vm76, %v72, %v74
  %81 = vst [vmem:[#allocation2 + $0x48] sm:$0xff] %v77
  %82 = vst [vmem:[#allocation2 + $0x50] sm:$0xf] %v78
  %v83 = vld [vmem:[%s0] sm:$0xff]
  %v84 = vld [vmem:[%s0 + $0x8] sm:$0xff]
  %87 = vrot.lane.b32.xlu0 %v83, 109
  %v88 = vpop.permute.xlu0 %87
  %89 = vrot.lane.b32.xlu0 %v84, 109
  %v90 = vpop.permute.xlu0 %89
  %v91 = vrot.slane %v88, 4
  %v92 = vrot.slane %v90, 4
  %v93 = vsel %vm38, %v91, %v92
  %vm94 = vcmask 891904
  %v95 = vsel %vm94, %v88, %v93
  %v96 = vsel %vm94, %v90, %v92
  %99 = vst [vmem:[#allocation2 + $0x60] sm:$0xff] %v95
  %100 = vst [vmem:[#allocation2 + $0x68] sm:$0xf] %v96
  %v101 = vld [vmem:[%s0] sm:$0xff]
  %v102 = vld [vmem:[%s0 + $0x8] sm:$0xff]
  %105 = vrot.lane.b32.xlu0 %v101, 108
  %v106 = vpop.permute.xlu0 %105
  %107 = vrot.lane.b32.xlu0 %v102, 108
  %v108 = vpop.permute.xlu0 %107
  %v109 = vrot.slane %v106, 4
  %v110 = vrot.slane %v108, 4
  %v111 = vsel %vm38, %v109, %v110
  %vm112 = vcmask 883712
  %v113 = vsel %vm112, %v106, %v111
  %v114 = vsel %vm112, %v108, %v110
  %117 = vst [vmem:[#allocation2 + $0x78] sm:$0xff] %v113
  %118 = vst [vmem:[#allocation2 + $0x80] sm:$0xf] %v114
  %v119 = vld [vmem:[%s0] sm:$0xff]
  %v120 = vld [vmem:[%s0 + $0x8] sm:$0xff]
  %123 = vrot.lane.b32.xlu0 %v119, 92
  %v124 = vpop.permute.xlu0 %123
  %125 = vrot.lane.b32.xlu0 %v120, 92
  %v126 = vpop.permute.xlu0 %125
  %v127 = vrot.slane %v124, 4
  %v128 = vrot.slane %v126, 4
  %v129 = vsel %vm38, %v127, %v128
  %vm130 = vcmask 752640
  %v131 = vsel %vm130, %v124, %v129
  %v132 = vsel %vm130, %v126, %v128
  %135 = vst [vmem:[#allocation2 + $0x90] sm:$0xff] %v131
  %136 = vst [vmem:[#allocation2 + $0x98] sm:$0xf] %v132
  %v137 = vld [vmem:[%s0] sm:$0xff]
  %v138 = vld [vmem:[%s0 + $0x8] sm:$0xff]
  %141 = vrot.lane.b32.xlu0 %v137, 91
  %v142 = vpop.permute.xlu0 %141
  %143 = vrot.lane.b32.xlu0 %v138, 91
  %v144 = vpop.permute.xlu0 %143
  %v145 = vrot.slane %v142, 4
  %v146 = vrot.slane %v144, 4
  %v147 = vsel %vm38, %v145, %v146
  %vm148 = vcmask 744448
  %v149 = vsel %vm148, %v142, %v147
  %v150 = vsel %vm148, %v144, %v146
  %153 = vst [vmem:[#allocation2 + $0xa8] sm:$0xff] %v149
  %154 = vst [vmem:[#allocation2 + $0xb0] sm:$0xf] %v150
  %v155 = vld [vmem:[%s0] sm:$0xff]
  %v156 = vld [vmem:[%s0 + $0x8] sm:$0xff]
  %159 = vrot.lane.b32.xlu0 %v155, 90
  %v160 = vpop.permute.xlu0 %159
  %161 = vrot.lane.b32.xlu0 %v156, 90
  %v162 = vpop.permute.xlu0 %161
  %v163 = vrot.slane %v160, 4
  %v164 = vrot.slane %v162, 4
  %v165 = vsel %vm38, %v163, %v164
  %vm166 = vcmask 736256
  %v167 = vsel %vm166, %v160, %v165
  %v168 = vsel %vm166, %v162, %v164
  %171 = vst [vmem:[#allocation2 + $0xc0] sm:$0xff] %v167
  %172 = vst [vmem:[#allocation2 + $0xc8] sm:$0xf] %v168
  %s173 = scalar_lea.vmem %s0, 16
  %v174 = vld [vmem:[%s173] sm:$0xff]
  %v175 = vld [vmem:[%s173 + $0x8] sm:$0xf]
  %176 = vst [vmem:[#allocation2 + $0xc] sm:$0xff] %v174
  %177 = vst [vmem:[#allocation2 + $0x14] sm:$0xf] %v175
  %v178 = vld [vmem:[%s173] sm:$0xff]
  %v179 = vld [vmem:[%s173 + $0x8] sm:$0xff]
  %182 = vrot.lane.b32.xlu0 %v178, 127
  %v183 = vpop.permute.xlu0 %182
  %184 = vrot.lane.b32.xlu0 %v179, 127
  %v185 = vpop.permute.xlu0 %184
  %v186 = vrot.slane %v183, 4
  %v187 = vrot.slane %v185, 4
  %v188 = vsel %vm38, %v186, %v187
  %v189 = vsel %vm40, %v183, %v188
  %v190 = vsel %vm40, %v185, %v187
  %193 = vst [vmem:[#allocation2 + $0x24] sm:$0xff] %v189
  %194 = vst [vmem:[#allocation2 + $0x2c] sm:$0xf] %v190
  %v195 = vld [vmem:[%s173] sm:$0xff]
  %v196 = vld [vmem:[%s173 + $0x8] sm:$0xff]
  %199 = vrot.lane.b32.xlu0 %v195, 126
  %v200 = vpop.permute.xlu0 %199
  %201 = vrot.lane.b32.xlu0 %v196, 126
  %v202 = vpop.permute.xlu0 %201
  %v203 = vrot.slane %v200, 4
  %v204 = vrot.slane %v202, 4
  %v205 = vsel %vm38, %v203, %v204
  %v206 = vsel %vm58, %v200, %v205
  %v207 = vsel %vm58, %v202, %v204
  %210 = vst [vmem:[#allocation2 + $0x3c] sm:$0xff] %v206
  %211 = vst [vmem:[#allocation2 + $0x44] sm:$0xf] %v207
  %v212 = vld [vmem:[%s173] sm:$0xff]
  %v213 = vld [vmem:[%s173 + $0x8] sm:$0xff]
  %216 = vrot.lane.b32.xlu0 %v212, 110
  %v217 = vpop.permute.xlu0 %216
  %218 = vrot.lane.b32.xlu0 %v213, 110
  %v219 = vpop.permute.xlu0 %218
  %v220 = vrot.slane %v217, 4
  %v221 = vrot.slane %v219, 4
  %v222 = vsel %vm38, %v220, %v221
  %v223 = vsel %vm76, %v217, %v222
  %v224 = vsel %vm76, %v219, %v221
  %227 = vst [vmem:[#allocation2 + $0x54] sm:$0xff] %v223
  %228 = vst [vmem:[#allocation2 + $0x5c] sm:$0xf] %v224
  %v229 = vld [vmem:[%s173] sm:$0xff]
  %v230 = vld [vmem:[%s173 + $0x8] sm:$0xff]
  %233 = vrot.lane.b32.xlu0 %v229, 109
  %v234 = vpop.permute.xlu0 %233
  %235 = vrot.lane.b32.xlu0 %v230, 109
  %v236 = vpop.permute.xlu0 %235
  %v237 = vrot.slane %v234, 4
  %v238 = vrot.slane %v236, 4
  %v239 = vsel %vm38, %v237, %v238
  %v240 = vsel %vm94, %v234, %v239
  %v241 = vsel %vm94, %v236, %v238
  %244 = vst [vmem:[#allocation2 + $0x6c] sm:$0xff] %v240
  %245 = vst [vmem:[#allocation2 + $0x74] sm:$0xf] %v241
  %v246 = vld [vmem:[%s173] sm:$0xff]
  %v247 = vld [vmem:[%s173 + $0x8] sm:$0xff]
  %250 = vrot.lane.b32.xlu0 %v246, 108
  %v251 = vpop.permute.xlu0 %250
  %252 = vrot.lane.b32.xlu0 %v247, 108
  %v253 = vpop.permute.xlu0 %252
  %v254 = vrot.slane %v251, 4
  %v255 = vrot.slane %v253, 4
  %v256 = vsel %vm38, %v254, %v255
  %v257 = vsel %vm112, %v251, %v256
  %v258 = vsel %vm112, %v253, %v255
  %261 = vst [vmem:[#allocation2 + $0x84] sm:$0xff] %v257
  %262 = vst [vmem:[#allocation2 + $0x8c] sm:$0xf] %v258
  %v263 = vld [vmem:[%s173] sm:$0xff]
  %v264 = vld [vmem:[%s173 + $0x8] sm:$0xff]
  %267 = vrot.lane.b32.xlu0 %v263, 92
  %v268 = vpop.permute.xlu0 %267
  %269 = vrot.lane.b32.xlu0 %v264, 92
  %v270 = vpop.permute.xlu0 %269
  %v271 = vrot.slane %v268, 4
  %v272 = vrot.slane %v270, 4
  %v273 = vsel %vm38, %v271, %v272
  %v274 = vsel %vm130, %v268, %v273
  %v275 = vsel %vm130, %v270, %v272
  %278 = vst [vmem:[#allocation2 + $0x9c] sm:$0xff] %v274
  %279 = vst [vmem:[#allocation2 + $0xa4] sm:$0xf] %v275
  %v280 = vld [vmem:[%s173] sm:$0xff]
  %v281 = vld [vmem:[%s173 + $0x8] sm:$0xff]
  %284 = vrot.lane.b32.xlu0 %v280, 91
  %v285 = vpop.permute.xlu0 %284
  %286 = vrot.lane.b32.xlu0 %v281, 91
  %v287 = vpop.permute.xlu0 %286
  %v288 = vrot.slane %v285, 4
  %v289 = vrot.slane %v287, 4
  %v290 = vsel %vm38, %v288, %v289
  %v291 = vsel %vm148, %v285, %v290
  %v292 = vsel %vm148, %v287, %v289
  %295 = vst [vmem:[#allocation2 + $0xb4] sm:$0xff] %v291
  %296 = vst [vmem:[#allocation2 + $0xbc] sm:$0xf] %v292
  %v297 = vld [vmem:[%s173] sm:$0xff]
  %v298 = vld [vmem:[%s173 + $0x8] sm:$0xff]
  %301 = vrot.lane.b32.xlu0 %v297, 90
  %v302 = vpop.permute.xlu0 %301
  %303 = vrot.lane.b32.xlu0 %v298, 90
  %v304 = vpop.permute.xlu0 %303
  %v305 = vrot.slane %v302, 4
  %v306 = vrot.slane %v304, 4
  %v307 = vsel %vm38, %v305, %v306
  %v308 = vsel %vm166, %v302, %v307
  %v309 = vsel %vm166, %v304, %v306
  %312 = vst [vmem:[#allocation2 + $0xcc] sm:$0xff] %v308
  %313 = vst [vmem:[#allocation2 + $0xd4] sm:$0xf] %v309
  %v314 = vld [vmem:[%s1] sm:$0xf]
  %v315 = vld [vmem:[%s1 + $0x4] sm:$0xf]
  %v316 = vld [vmem:[#allocation2] sm:$0xff]
  %v317 = vld [vmem:[#allocation2 + $0x8] sm:$0xff]
  %v318 = vld [vmem:[#allocation2 + $0x10] sm:$0xff]
  %v319 = vld [vmem:[#allocation2 + $0x18] sm:$0xff]
  %v320 = vld [vmem:[#allocation2 + $0x20] sm:$0xff]
  %v321 = vld [vmem:[#allocation2 + $0x28] sm:$0xff]
  %v322 = vld [vmem:[#allocation2 + $0x30] sm:$0xff]
  %v323 = vld [vmem:[#allocation2 + $0x38] sm:$0xff]
  %v324 = vld [vmem:[#allocation2 + $0x40] sm:$0xff]
  %v325 = vld [vmem:[#allocation2 + $0x48] sm:$0xff]
  %v326 = vld [vmem:[#allocation2 + $0x50] sm:$0xff]
  %v327 = vld [vmem:[#allocation2 + $0x58] sm:$0xff]
  %v328 = vld [vmem:[#allocation2 + $0x60] sm:$0xff]
  %v329 = vld [vmem:[#allocation2 + $0x68] sm:$0xff]
  %v330 = vld [vmem:[#allocation2 + $0x70] sm:$0xff]
  %v331 = vld [vmem:[#allocation2 + $0x78] sm:$0xff]
  %v332 = vld [vmem:[#allocation2 + $0x80] sm:$0xff]
  %v333 = vld [vmem:[#allocation2 + $0x88] sm:$0xff]
  %v334 = vld [vmem:[#allocation2 + $0x90] sm:$0xff]
  %v335 = vld [vmem:[#allocation2 + $0x98] sm:$0xff]
  %v336 = vld [vmem:[#allocation2 + $0xa0] sm:$0xff]
  %v337 = vld [vmem:[#allocation2 + $0xa8] sm:$0xff]
  %v338 = vld [vmem:[#allocation2 + $0xb0] sm:$0xff]
  %v339 = vld [vmem:[#allocation2 + $0xb8] sm:$0xff]
  %v340 = vld [vmem:[#allocation2 + $0xc0] sm:$0xff]
  %v341 = vld [vmem:[#allocation2 + $0xc8] sm:$0xff]
  %v342 = vld [vmem:[#allocation2 + $0xd0] sm:$0xff]
  %v343 = vld [vmem:[%s2] sm:$0xff]
  %v344 = vld [vmem:[%s2 + $0x8] sm:$0xff]
  %346 = vset.pattern.permute.xlu0 0
  %347 = vperm.xlu0 %346, %v343
  %v348 = vpop.permute.xlu0 %347
  %351 = vset.pattern.permute.xlu0 0
  %352 = vperm.xlu0 %351, %v344
  %v353 = vpop.permute.xlu0 %352
  %v357 = vunpack.c.l.b16 %v314
  %v358 = vunpack.c.l.b16 %v315
  %v359 = vpack.c.b16 %v358, %v357
  %v387 = vunpack.c.l.b16 %v316
  %v388 = vunpack.c.h.b16 %v316
  %v389 = vunpack.c.l.b16 %v317
  %v390 = vunpack.c.h.b16 %v317
  %v391 = vunpack.c.l.b16 %v318
  %v392 = vunpack.c.h.b16 %v318
  %v393 = vunpack.c.l.b16 %v319
  %v394 = vunpack.c.h.b16 %v319
  %v395 = vunpack.c.l.b16 %v320
  %v396 = vunpack.c.h.b16 %v320
  %v397 = vunpack.c.l.b16 %v321
  %v398 = vunpack.c.h.b16 %v321
  %v399 = vunpack.c.l.b16 %v322
  %v400 = vunpack.c.h.b16 %v322
  %v401 = vunpack.c.l.b16 %v323
  %v402 = vunpack.c.h.b16 %v323
  %v403 = vunpack.c.l.b16 %v324
  %v404 = vunpack.c.h.b16 %v324
  %v405 = vunpack.c.l.b16 %v325
  %v406 = vunpack.c.h.b16 %v325
  %v407 = vunpack.c.l.b16 %v326
  %v408 = vunpack.c.h.b16 %v326
  %v409 = vunpack.c.l.b16 %v327
  %v410 = vunpack.c.h.b16 %v327
  %v411 = vunpack.c.l.b16 %v328
  %v412 = vunpack.c.h.b16 %v328
  %v413 = vunpack.c.l.b16 %v329
  %v414 = vunpack.c.h.b16 %v329
  %v415 = vunpack.c.l.b16 %v330
  %v416 = vunpack.c.h.b16 %v330
  %v417 = vunpack.c.l.b16 %v331
  %v418 = vunpack.c.h.b16 %v331
  %v419 = vunpack.c.l.b16 %v332
  %v420 = vunpack.c.h.b16 %v332
  %v421 = vunpack.c.l.b16 %v333
  %v422 = vunpack.c.h.b16 %v333
  %v423 = vunpack.c.l.b16 %v334
  %v424 = vunpack.c.h.b16 %v334
  %v425 = vunpack.c.l.b16 %v335
  %v426 = vunpack.c.h.b16 %v335
  %v427 = vunpack.c.l.b16 %v336
  %v428 = vunpack.c.h.b16 %v336
  %v429 = vunpack.c.l.b16 %v337
  %v430 = vunpack.c.h.b16 %v337
  %v431 = vunpack.c.l.b16 %v338
  %v432 = vunpack.c.h.b16 %v338
  %v433 = vunpack.c.l.b16 %v339
  %v434 = vunpack.c.h.b16 %v339
  %v435 = vunpack.c.l.b16 %v340
  %v436 = vunpack.c.h.b16 %v340
  %v437 = vunpack.c.l.b16 %v341
  %v438 = vunpack.c.h.b16 %v341
  %v439 = vunpack.c.l.b16 %v342
  %v440 = vunpack.c.h.b16 %v342
  %v441 = vpack.c.b16 %v393, %v387
  %v442 = vpack.c.b16 %v394, %v388
  %v443 = vpack.c.b16 %v395, %v389
  %v444 = vpack.c.b16 %v396, %v390
  %v445 = vpack.c.b16 %v397, %v391
  %v446 = vpack.c.b16 %v398, %v392
  %v447 = vpack.c.b16 %v405, %v399
  %v448 = vpack.c.b16 %v406, %v400
  %v449 = vpack.c.b16 %v407, %v401
  %v450 = vpack.c.b16 %v408, %v402
  %v451 = vpack.c.b16 %v409, %v403
  %v452 = vpack.c.b16 %v410, %v404
  %v453 = vpack.c.b16 %v417, %v411
  %v454 = vpack.c.b16 %v418, %v412
  %v455 = vpack.c.b16 %v419, %v413
  %v456 = vpack.c.b16 %v420, %v414
  %v457 = vpack.c.b16 %v421, %v415
  %v458 = vpack.c.b16 %v422, %v416
  %v459 = vpack.c.b16 %v429, %v423
  %v460 = vpack.c.b16 %v430, %v424
  %v461 = vpack.c.b16 %v431, %v425
  %v462 = vpack.c.b16 %v432, %v426
  %v463 = vpack.c.b16 %v433, %v427
  %v464 = vpack.c.b16 %v434, %v428
  %v465 = vpack.c.b16 %v435, %v435
  %v466 = vpack.c.b16 %v436, %v436
  %v467 = vpack.c.b16 %v437, %v437
  %v468 = vpack.c.b16 %v438, %v438
  %v469 = vpack.c.b16 %v439, %v439
  %v470 = vpack.c.b16 %v440, %v440
  %vm495 = vcmask 588800
  %v497 = vsel %vm495, %v359, 0
  %vm499 = vcmask 1043456
  %v501 = vsel %vm499, %v465, 0
  %v504 = vsel %vm499, %v466, 0
  %v507 = vsel %vm499, %v467, 0
  %v510 = vsel %vm499, %v468, 0
  %v513 = vsel %vm499, %v469, 0
  %v516 = vsel %vm499, %v470, 0
  %518 = vmatprep.subr.bf16.mxu0 %v442
  %519 = vmatpush1.bf16.msra.mxu0 %v441
  %520 = vmatprep.subr.bf16.mxu0 %v448
  %521 = vmatpush1.bf16.msra.mxu0 %v447
  %522 = vmatprep.subr.bf16.mxu0 %v454
  %523 = vmatpush1.bf16.msra.mxu0 %v453
  %524 = vmatprep.subr.bf16.mxu0 %v460
  %525 = vmatpush1.bf16.msra.mxu0 %v459
  %526 = vmatprep.subr.bf16.mxu0 %v504
  %527 = vmatpush1.bf16.msra.mxu0 %v501
  %528 = vmatprep.subr.bf16.mxu0 0
  %529 = vmatpush1.bf16.msra.mxu0 0
  %530 = vmatprep.subr.bf16.mxu0 0
  %531 = vmatpush1.bf16.msra.mxu0 0
  %532 = vmatprep.subr.bf16.mxu0 0
  %533 = vmatpush1.bf16.msra.mxu0 0
  %534 = vmatprep.subr.bf16.mxu0 0
  %535 = vmatpush1.bf16.msra.mxu0 0
  %536 = vmatprep.subr.bf16.mxu0 0
  %537 = vmatpush1.bf16.msra.mxu0 0
  %538 = vmatprep.subr.bf16.mxu0 0
  %539 = vmatpush1.bf16.msra.mxu0 0
  %540 = vmatprep.subr.bf16.mxu0 0
  %541 = vmatpush1.bf16.msra.mxu0 0
  %542 = vmatprep.subr.bf16.mxu0 0
  %543 = vmatpush1.bf16.msra.mxu0 0
  %544 = vmatprep.subr.bf16.mxu0 0
  %545 = vmatpush1.bf16.msra.mxu0 0
  %546 = vmatprep.subr.bf16.mxu0 0
  %547 = vmatpush1.bf16.msra.mxu0 0
  %548 = vmatprep.subr.bf16.mxu0 0
  %549 = vmatpush1.bf16.msra.mxu0 0
  %550 = vmatprep.mubr.bf16.mxu0 0
  %551 = vmatmul.mubr.bf16.gmra.mrb[0].mxu0 %v497
  %v552 = vpop.f32.mrb[0].mxu0
  %v553 = vadd.f32 %v348, %v552
  %v554 = vpop.f32.mrb[0].mxu0
  %v555 = vadd.f32 %v348, %v554
  %v556 = vpop.f32.mrb[0].mxu0
  %v557 = vadd.f32 %v353, %v556
  %v558 = vpop.f32.mrb[0].mxu0
  %v559 = vadd.f32 %v353, %v558
  %560 = vdwg.mxu0
  %561 = vmatprep.subr.bf16.mxu0 %v444
  %562 = vmatpush1.bf16.msra.mxu0 %v443
  %563 = vmatprep.subr.bf16.mxu0 %v450
  %564 = vmatpush1.bf16.msra.mxu0 %v449
  %565 = vmatprep.subr.bf16.mxu0 %v456
  %566 = vmatpush1.bf16.msra.mxu0 %v455
  %567 = vmatprep.subr.bf16.mxu0 %v462
  %568 = vmatpush1.bf16.msra.mxu0 %v461
  %569 = vmatprep.subr.bf16.mxu0 %v510
  %570 = vmatpush1.bf16.msra.mxu0 %v507
  %571 = vmatprep.subr.bf16.mxu0 0
  %572 = vmatpush1.bf16.msra.mxu0 0
  %573 = vmatprep.subr.bf16.mxu0 0
  %574 = vmatpush1.bf16.msra.mxu0 0
  %575 = vmatprep.subr.bf16.mxu0 0
  %576 = vmatpush1.bf16.msra.mxu0 0
  %577 = vmatprep.subr.bf16.mxu0 0
  %578 = vmatpush1.bf16.msra.mxu0 0
  %579 = vmatprep.subr.bf16.mxu0 0
  %580 = vmatpush1.bf16.msra.mxu0 0
  %581 = vmatprep.subr.bf16.mxu0 0
  %582 = vmatpush1.bf16.msra.mxu0 0
  %583 = vmatprep.subr.bf16.mxu0 0
  %584 = vmatpush1.bf16.msra.mxu0 0
  %585 = vmatprep.subr.bf16.mxu0 0
  %586 = vmatpush1.bf16.msra.mxu0 0
  %587 = vmatprep.subr.bf16.mxu0 0
  %588 = vmatpush1.bf16.msra.mxu0 0
  %589 = vmatprep.subr.bf16.mxu0 0
  %590 = vmatpush1.bf16.msra.mxu0 0
  %591 = vmatprep.subr.bf16.mxu0 0
  %592 = vmatpush1.bf16.msra.mxu0 0
  %593 = vmatprep.mubr.bf16.mxu0 0
  %594 = vmatmul.mubr.bf16.gmra.mrb[0].mxu0 %v497
  %v595 = vpop.f32.mrb[0].mxu0
  %v596 = vadd.f32 %v348, %v595
  %v597 = vpop.f32.mrb[0].mxu0
  %v598 = vadd.f32 %v348, %v597
  %v599 = vpop.f32.mrb[0].mxu0
  %v600 = vadd.f32 %v353, %v599
  %v601 = vpop.f32.mrb[0].mxu0
  %v602 = vadd.f32 %v353, %v601
  %603 = vdwg.mxu0
  %604 = vmatprep.subr.bf16.mxu0 %v446
  %605 = vmatpush1.bf16.msra.mxu0 %v445
  %606 = vmatprep.subr.bf16.mxu0 %v452
  %607 = vmatpush1.bf16.msra.mxu0 %v451
  %608 = vmatprep.subr.bf16.mxu0 %v458
  %609 = vmatpush1.bf16.msra.mxu0 %v457
  %610 = vmatprep.subr.bf16.mxu0 %v464
  %611 = vmatpush1.bf16.msra.mxu0 %v463
  %612 = vmatprep.subr.bf16.mxu0 %v516
  %613 = vmatpush1.bf16.msra.mxu0 %v513
  %614 = vmatprep.subr.bf16.mxu0 0
  %615 = vmatpush1.bf16.msra.mxu0 0
  %616 = vmatprep.subr.bf16.mxu0 0
  %617 = vmatpush1.bf16.msra.mxu0 0
  %618 = vmatprep.subr.bf16.mxu0 0
  %619 = vmatpush1.bf16.msra.mxu0 0
  %620 = vmatprep.subr.bf16.mxu0 0
  %621 = vmatpush1.bf16.msra.mxu0 0
  %622 = vmatprep.subr.bf16.mxu0 0
  %623 = vmatpush1.bf16.msra.mxu0 0
  %624 = vmatprep.subr.bf16.mxu0 0
  %625 = vmatpush1.bf16.msra.mxu0 0
  %626 = vmatprep.subr.bf16.mxu0 0
  %627 = vmatpush1.bf16.msra.mxu0 0
  %628 = vmatprep.subr.bf16.mxu0 0
  %629 = vmatpush1.bf16.msra.mxu0 0
  %630 = vmatprep.subr.bf16.mxu0 0
  %631 = vmatpush1.bf16.msra.mxu0 0
  %632 = vmatprep.subr.bf16.mxu0 0
  %633 = vmatpush1.bf16.msra.mxu0 0
  %634 = vmatprep.subr.bf16.mxu0 0
  %635 = vmatpush1.bf16.msra.mxu0 0
  %636 = vmatprep.mubr.bf16.mxu0 0
  %637 = vmatmul.mubr.bf16.gmra.mrb[0].mxu0 %v497
  %v638 = vpop.f32.mrb[0].mxu0
  %v639 = vadd.f32 %v348, %v638
  %v640 = vpop.f32.mrb[0].mxu0
  %v641 = vadd.f32 %v348, %v640
  %v642 = vpop.f32.mrb[0].mxu0
  %v643 = vadd.f32 %v353, %v642
  %v644 = vpop.f32.mrb[0].mxu0
  %v645 = vadd.f32 %v353, %v644
  %646 = vdwg.mxu0
  %v647 = vmax.f32 %v553, 0.0
  %v648 = vmax.f32 %v555, 0.0
  %v649 = vmax.f32 %v596, 0.0
  %v650 = vmax.f32 %v598, 0.0
  %v651 = vmax.f32 %v639, 0.0
  %v652 = vmax.f32 %v641, 0.0
  %v653 = vmax.f32 %v557, 0.0
  %v654 = vmax.f32 %v559, 0.0
  %v655 = vmax.f32 %v600, 0.0
  %v656 = vmax.f32 %v602, 0.0
  %v657 = vmax.f32 %v643, 0.0
  %v658 = vmax.f32 %v645, 0.0
  %v659 = vld [vmem:[%s5] sm:$0x3f]
  %v661 = vlaneseq
  %v662 = vshrl.u32 %v661, 7
  %v663 = vsub.s32 0, %v662
  %v664 = vrot.slane %v659, %v663
  %v665 = vlaneseq
  %v666 = vshrl.u32 %v665, 7
  %v667 = vsub.s32 1, %v666
  %v668 = vrot.slane %v659, %v667
  %v669 = vlaneseq
  %v670 = vshrl.u32 %v669, 7
  %v671 = vsub.s32 2, %v670
  %v672 = vrot.slane %v659, %v671
  %v673 = vlaneseq
  %v674 = vshrl.u32 %v673, 7
  %v675 = vsub.s32 3, %v674
  %v676 = vrot.slane %v659, %v675
  %v677 = vlaneseq
  %v678 = vshrl.u32 %v677, 7
  %v679 = vsub.s32 4, %v678
  %v680 = vrot.slane %v659, %v679
  %v681 = vlaneseq
  %v682 = vshrl.u32 %v681, 7
  %v683 = vsub.s32 5, %v682
  %v684 = vrot.slane %v659, %v683
  %v691 = vmul.f32 %v647, %v664
  %v692 = vmul.f32 %v648, %v668
  %v693 = vmul.f32 %v649, %v672
  %v694 = vmul.f32 %v650, %v676
  %v695 = vmul.f32 %v651, %v680
  %v696 = vmul.f32 %v652, %v684
  %v697 = vmul.f32 %v653, %v664
  %v698 = vmul.f32 %v654, %v668
  %v699 = vmul.f32 %v655, %v672
  %v700 = vmul.f32 %v656, %v676
  %v701 = vmul.f32 %v657, %v680
  %v702 = vmul.f32 %v658, %v684
  %v703 = vld [vmem:[%s3] sm:$0xf]
  %v704 = vpack.c.bf16 %v697, %v691
  %v705 = vpack.c.bf16 %v698, %v692
  %v706 = vpack.c.bf16 %v699, %v693
  %v707 = vpack.c.bf16 %v700, %v694
  %v708 = vpack.c.bf16 %v701, %v695
  %v709 = vpack.c.bf16 %v702, %v696
  %v710 = vld [vmem:[%s4] sm:$0xff]
  %712 = vset.pattern.permute.xlu0 0
  %713 = vperm.xlu0 %712, %v710
  %v714 = vpop.permute.xlu0 %713
  %vm716 = vcmask 130048
  %v718 = vsel %vm716, %v703, 0
  %720 = vmatprep.subr.bf16.mxu0 %v705
  %721 = vmatpush1.bf16.msra.mxu0 %v704
  %722 = vmatprep.subr.bf16.mxu0 0
  %723 = vmatpush1.bf16.msra.mxu0 0
  %724 = vmatprep.subr.bf16.mxu0 0
  %725 = vmatpush1.bf16.msra.mxu0 0
  %726 = vmatprep.subr.bf16.mxu0 0
  %727 = vmatpush1.bf16.msra.mxu0 0
  %728 = vmatprep.subr.bf16.mxu0 0
  %729 = vmatpush1.bf16.msra.mxu0 0
  %730 = vmatprep.subr.bf16.mxu0 0
  %731 = vmatpush1.bf16.msra.mxu0 0
  %732 = vmatprep.subr.bf16.mxu0 0
  %733 = vmatpush1.bf16.msra.mxu0 0
  %734 = vmatprep.subr.bf16.mxu0 0
  %735 = vmatpush1.bf16.msra.mxu0 0
  %736 = vmatprep.subr.bf16.mxu0 0
  %737 = vmatpush1.bf16.msra.mxu0 0
  %738 = vmatprep.subr.bf16.mxu0 0
  %739 = vmatpush1.bf16.msra.mxu0 0
  %740 = vmatprep.subr.bf16.mxu0 0
  %741 = vmatpush1.bf16.msra.mxu0 0
  %742 = vmatprep.subr.bf16.mxu0 0
  %743 = vmatpush1.bf16.msra.mxu0 0
  %744 = vmatprep.subr.bf16.mxu0 0
  %745 = vmatpush1.bf16.msra.mxu0 0
  %746 = vmatprep.subr.bf16.mxu0 0
  %747 = vmatpush1.bf16.msra.mxu0 0
  %748 = vmatprep.subr.bf16.mxu0 0
  %749 = vmatpush1.bf16.msra.mxu0 0
  %750 = vmatprep.subr.bf16.mxu0 0
  %751 = vmatpush1.bf16.msra.mxu0 0
  %752 = vmatprep.mubr.bf16.mxu0 0
  %753 = vmatmul.mubr.bf16.gmra.mrb[0].mxu0 %v718
  %v754 = vpop.f32.mrb[0].mxu0
  %v755 = vadd.f32 %v714, %v754
  %v756 = vpop.f32.mrb[0].mxu0
  %v757 = vadd.f32 %v714, %v756
  %v758 = vpop.f32.mrb[0].mxu0
  %v759 = vpop.f32.mrb[0].mxu0
  %760 = vdwg.mxu0
  %761 = vmatprep.subr.bf16.mxu0 %v707
  %762 = vmatpush1.bf16.msra.mxu0 %v706
  %763 = vmatprep.subr.bf16.mxu0 0
  %764 = vmatpush1.bf16.msra.mxu0 0
  %765 = vmatprep.subr.bf16.mxu0 0
  %766 = vmatpush1.bf16.msra.mxu0 0
  %767 = vmatprep.subr.bf16.mxu0 0
  %768 = vmatpush1.bf16.msra.mxu0 0
  %769 = vmatprep.subr.bf16.mxu0 0
  %770 = vmatpush1.bf16.msra.mxu0 0
  %771 = vmatprep.subr.bf16.mxu0 0
  %772 = vmatpush1.bf16.msra.mxu0 0
  %773 = vmatprep.subr.bf16.mxu0 0
  %774 = vmatpush1.bf16.msra.mxu0 0
  %775 = vmatprep.subr.bf16.mxu0 0
  %776 = vmatpush1.bf16.msra.mxu0 0
  %777 = vmatprep.subr.bf16.mxu0 0
  %778 = vmatpush1.bf16.msra.mxu0 0
  %779 = vmatprep.subr.bf16.mxu0 0
  %780 = vmatpush1.bf16.msra.mxu0 0
  %781 = vmatprep.subr.bf16.mxu0 0
  %782 = vmatpush1.bf16.msra.mxu0 0
  %783 = vmatprep.subr.bf16.mxu0 0
  %784 = vmatpush1.bf16.msra.mxu0 0
  %785 = vmatprep.subr.bf16.mxu0 0
  %786 = vmatpush1.bf16.msra.mxu0 0
  %787 = vmatprep.subr.bf16.mxu0 0
  %788 = vmatpush1.bf16.msra.mxu0 0
  %789 = vmatprep.subr.bf16.mxu0 0
  %790 = vmatpush1.bf16.msra.mxu0 0
  %791 = vmatprep.subr.bf16.mxu0 0
  %792 = vmatpush1.bf16.msra.mxu0 0
  %793 = vmatprep.mubr.bf16.mxu0 0
  %794 = vmatmul.mubr.bf16.gmra.mrb[0].mxu0 %v718
  %v795 = vpop.f32.mrb[0].mxu0
  %v796 = vadd.f32 %v714, %v795
  %v797 = vpop.f32.mrb[0].mxu0
  %v798 = vadd.f32 %v714, %v797
  %v799 = vpop.f32.mrb[0].mxu0
  %v800 = vpop.f32.mrb[0].mxu0
  %801 = vdwg.mxu0
  %802 = vmatprep.subr.bf16.mxu0 %v709
  %803 = vmatpush1.bf16.msra.mxu0 %v708
  %804 = vmatprep.subr.bf16.mxu0 0
  %805 = vmatpush1.bf16.msra.mxu0 0
  %806 = vmatprep.subr.bf16.mxu0 0
  %807 = vmatpush1.bf16.msra.mxu0 0
  %808 = vmatprep.subr.bf16.mxu0 0
  %809 = vmatpush1.bf16.msra.mxu0 0
  %810 = vmatprep.subr.bf16.mxu0 0
  %811 = vmatpush1.bf16.msra.mxu0 0
  %812 = vmatprep.subr.bf16.mxu0 0
  %813 = vmatpush1.bf16.msra.mxu0 0
  %814 = vmatprep.subr.bf16.mxu0 0
  %815 = vmatpush1.bf16.msra.mxu0 0
  %816 = vmatprep.subr.bf16.mxu0 0
  %817 = vmatpush1.bf16.msra.mxu0 0
  %818 = vmatprep.subr.bf16.mxu0 0
  %819 = vmatpush1.bf16.msra.mxu0 0
  %820 = vmatprep.subr.bf16.mxu0 0
  %821 = vmatpush1.bf16.msra.mxu0 0
  %822 = vmatprep.subr.bf16.mxu0 0
  %823 = vmatpush1.bf16.msra.mxu0 0
  %824 = vmatprep.subr.bf16.mxu0 0
  %825 = vmatpush1.bf16.msra.mxu0 0
  %826 = vmatprep.subr.bf16.mxu0 0
  %827 = vmatpush1.bf16.msra.mxu0 0
  %828 = vmatprep.subr.bf16.mxu0 0
  %829 = vmatpush1.bf16.msra.mxu0 0
  %830 = vmatprep.subr.bf16.mxu0 0
  %831 = vmatpush1.bf16.msra.mxu0 0
  %832 = vmatprep.subr.bf16.mxu0 0
  %833 = vmatpush1.bf16.msra.mxu0 0
  %834 = vmatprep.mubr.bf16.mxu0 0
  %835 = vmatmul.mubr.bf16.gmra.mrb[0].mxu0 %v718
  %v836 = vpop.f32.mrb[0].mxu0
  %v837 = vadd.f32 %v714, %v836
  %v838 = vpop.f32.mrb[0].mxu0
  %v839 = vadd.f32 %v714, %v838
  %v840 = vpop.f32.mrb[0].mxu0
  %v841 = vpop.f32.mrb[0].mxu0
  %842 = vdwg.mxu0
  %843 = vst [vmem:[%s6] sm:$0xff] %v755
  %844 = vst [vmem:[%s6 + $0x8] sm:$0xff] %v757
  %845 = vst [vmem:[%s6 + $0x10] sm:$0xff] %v796
  %s846 = scalar_lea.vmem %s6, 24
  %847 = vst [vmem:[%s846] sm:$0xff] %v798
  %848 = vst [vmem:[%s846 + $0x8] sm:$0xff] %v837
  %849 = vst [vmem:[%s846 + $0x10] sm:$0xff] %v839
  // Predicated region
  $region26: #{bisehead_forward.1} parent=0 // pred_check
    _
  $region27: #{bisehead_forward.1} parent=0 // pred_check_branch
    %851 = sbr.rel (0) target = $region29
  $region28: #{bisehead_forward.1} parent=0 // pred_region
    _
  $region29: #{bisehead_forward.1} parent=0 // pred_fallthru
    _
  // Predicated region
  $region30: #{bisehead_forward.1} parent=0 // pred_check
    _
  $region31: #{bisehead_forward.1} parent=0 // pred_check_branch
    %853 = sbr.rel (0) target = $region33
  $region32: #{bisehead_forward.1} parent=0 // pred_region
    _
  $region33: #{bisehead_forward.1} parent=0 // pred_fallthru
    _

</llo_original>
